<compile_context>
chip_gen: v5e
topology: v5e:2x2
jax: 0.10.0
libtpu: 0.0.40
codegen_flags: <defaults>
</compile_context>

<pallas_src>
import jax
import jax.numpy as jnp
from jax.experimental import pallas as pl
from jax.experimental.pallas import tpu as pltpu


def mlp_bn_kernel(x_ref, p_ref, o_ref):
    eps = 1e-5
    B = x_ref.shape[0]
    inv_b = 1.0 / B

    x = x_ref[...]                      # (B, 20) f32

    # Static, sublane-aligned slices of the packed parameter block (48, 10):
    #   rows  0:24 -> W1^T (rows 0:20 used)
    #   rows 24:40 -> W2^T (rows 24:34 used)
    #   rows 40:48 -> g1, be1, g2, be2 (rows 40:44 used)
    w1 = p_ref[0:20, :]                 # (20, 10), aligned start
    w2 = p_ref[24:34, :]                # (10, 10), aligned start
    bn = p_ref[40:48, :]                # (8, 10), one aligned tile, loaded once
    g1, be1, g2, be2 = bn[0:1, :], bn[1:2, :], bn[2:3, :], bn[3:4, :]

    # linear1 (bias omitted: cancelled exactly by the BN mean subtraction below)
    y = jnp.dot(x, w1, preferred_element_type=jnp.float32)      # (B, 10)

    # BN1 (training-mode batch stats, biased variance), fused sum/sumsq reduction,
    # folded affine, fused ReLU.
    mom1 = jnp.sum(jnp.concatenate([y, y * y], axis=1), axis=0, keepdims=True)  # (1, 20)
    mean1 = mom1[:, 0:10] * inv_b
    var1 = jnp.maximum(mom1[:, 10:20] * inv_b - mean1 * mean1, 0.0)
    scale1 = g1 * jax.lax.rsqrt(var1 + eps)
    shift1 = be1 - mean1 * scale1
    y = jnp.maximum(y * scale1 + shift1, 0.0)

    # linear2 (bias omitted, same reason)
    z = jnp.dot(y, w2, preferred_element_type=jnp.float32)      # (B, 10)

    # BN2
    mom2 = jnp.sum(jnp.concatenate([z, z * z], axis=1), axis=0, keepdims=True)  # (1, 20)
    mean2 = mom2[:, 0:10] * inv_b
    var2 = jnp.maximum(mom2[:, 10:20] * inv_b - mean2 * mean2, 0.0)
    scale2 = g2 * jax.lax.rsqrt(var2 + eps)
    shift2 = be2 - mean2 * scale2

    o_ref[...] = (z * scale2 + shift2).astype(o_ref.dtype)


def model_forward(x, params):
    """x: (B, 20) float32. params['packed']: (48, 10) float32 sublane-aligned parameter block."""
    B = x.shape[0]
    packed = params["packed"]

    vmem_spec = pl.BlockSpec(memory_space=pltpu.MemorySpace.VMEM)

    # NOTE: at large B, add a batch-tiled grid + pltpu.CompilerParams(vmem_limit_bytes=...)
    # (v7x has only 64 MiB VMEM per TC); at B=8 the whole problem fits in one block.
    return pl.pallas_call(
        mlp_bn_kernel,
        out_shape=jax.ShapeDtypeStruct((B, 10), jnp.float32),
        in_specs=[vmem_spec, vmem_spec],
        out_specs=vmem_spec,
    )(x, packed)


def init_params(key):
    """Deterministic init mirroring the PyTorch module's parameter shapes.
    Linear: uniform(-1/sqrt(fan_in), 1/sqrt(fan_in)); BatchNorm: weight=1, bias=0."""
    k1, k2, k3, k4 = jax.random.split(key, 4)
    bound1 = 1.0 / jnp.sqrt(20.0)
    bound2 = 1.0 / jnp.sqrt(10.0)
    w1 = jax.random.uniform(k1, (10, 20), jnp.float32, -bound1, bound1)
    b1 = jax.random.uniform(k2, (1, 10), jnp.float32, -bound1, bound1)
    w2 = jax.random.uniform(k3, (10, 10), jnp.float32, -bound2, bound2)
    b2 = jax.random.uniform(k4, (1, 10), jnp.float32, -bound2, bound2)
    g1 = jnp.ones((1, 10), jnp.float32)
    be1 = jnp.zeros((1, 10), jnp.float32)
    g2 = jnp.ones((1, 10), jnp.float32)
    be2 = jnp.zeros((1, 10), jnp.float32)

    # Single packed parameter block handed to the kernel. Each section is padded to an 8-row
    # (sublane) boundary so all kernel slices start on (8,128) tile boundaries:
    #   rows  0:24  W1^T (20 used)   rows 24:40  W2^T (10 used)   rows 40:48  g1,be1,g2,be2 (4 used)
    # Linear biases are excluded — they cancel under training-mode BN and are only kept below
    # for the reference check.
    def pad_rows(a, rows):
        return jnp.concatenate(
            [a, jnp.zeros((rows - a.shape[0], a.shape[1]), a.dtype)], axis=0)

    packed = jnp.concatenate(
        [pad_rows(w1.T, 24),
         pad_rows(w2.T, 16),
         pad_rows(jnp.concatenate([g1, be1, g2, be2], axis=0), 8)],
        axis=0)  # (48, 10)

    return {
        "packed": packed,
        "w1t": w1.T, "b1": b1, "g1": g1, "be1": be1,
        "w2t": w2.T, "b2": b2, "g2": g2, "be2": be2,
    }


if __name__ == "__main__":
    key = jax.random.PRNGKey(0)
    kp, kx = jax.random.split(key)
    params = init_params(kp)

    # Batch size > 1 so training-mode BatchNorm1d is well-defined (PyTorch errors on batch=1
    # in training mode anyway).
    B = 8
    x = jax.random.normal(kx, (B, 20), jnp.float32)

    out = model_forward(x, params)
    out = jax.block_until_ready(out)

    # Pure-JAX reference (includes the linear biases) — verifies the bias-drop equivalence.
    # TODO(synk): running_mean/running_var updates of stateful nn.BatchNorm1d are not modeled.
    def ref(x, p):
        eps = 1e-5
        y = x @ p["w1t"] + p["b1"]
        m = y.mean(0, keepdims=True)
        v = ((y - m) ** 2).mean(0, keepdims=True)
        y = (y - m) / jnp.sqrt(v + eps) * p["g1"] + p["be1"]
        y = jnp.maximum(y, 0.0)
        z = y @ p["w2t"] + p["b2"]
        m2 = z.mean(0, keepdims=True)
        v2 = ((z - m2) ** 2).mean(0, keepdims=True)
        return (z - m2) / jnp.sqrt(v2 + eps) * p["g2"] + p["be2"]

    expected = ref(x, params)
    assert out.shape == (B, 10)
    assert jnp.allclose(out, expected, atol=1e-4, rtol=1e-4)
    print("KERNEL_OK")
</pallas_src>

<mosaic_0001>
module attributes {stable_mosaic.version = 11 : i64} {
  func.func @mlp_bn_kernel(%arg0: memref<8x20xf32, #tpu.memory_space<vmem>>, %arg1: memref<48x10xf32, #tpu.memory_space<vmem>>, %arg2: memref<8x10xf32, #tpu.memory_space<vmem>>) attributes {dimension_semantics = [], scalar_prefetch = 0 : i64, scratch_operands = 0 : i64, tpu.core_type = #tpu.core_type<tc>} {
    %c0 = arith.constant 0 : index
    %c0_0 = arith.constant 0 : index
    %0 = vector.load %arg0[%c0, %c0_0] : memref<8x20xf32, #tpu.memory_space<vmem>>, vector<8x20xf32>
    %c0_1 = arith.constant 0 : index
    %c0_2 = arith.constant 0 : index
    %1 = vector.load %arg1[%c0_1, %c0_2] : memref<48x10xf32, #tpu.memory_space<vmem>>, vector<20x10xf32>
    %c24 = arith.constant 24 : index
    %c0_3 = arith.constant 0 : index
    %2 = vector.load %arg1[%c24, %c0_3] : memref<48x10xf32, #tpu.memory_space<vmem>>, vector<10x10xf32>
    %c40 = arith.constant 40 : index
    %c0_4 = arith.constant 0 : index
    %3 = vector.load %arg1[%c40, %c0_4] : memref<48x10xf32, #tpu.memory_space<vmem>>, vector<8x10xf32>
    %4 = vector.extract_strided_slice %3 {offsets = [0, 0], sizes = [1, 10], strides = [1, 1]} : vector<8x10xf32> to vector<1x10xf32>
    %5 = vector.extract_strided_slice %3 {offsets = [1, 0], sizes = [1, 10], strides = [1, 1]} : vector<8x10xf32> to vector<1x10xf32>
    %6 = vector.extract_strided_slice %3 {offsets = [2, 0], sizes = [1, 10], strides = [1, 1]} : vector<8x10xf32> to vector<1x10xf32>
    %7 = vector.extract_strided_slice %3 {offsets = [3, 0], sizes = [1, 10], strides = [1, 1]} : vector<8x10xf32> to vector<1x10xf32>
    %cst = arith.constant dense<0.000000e+00> : vector<8x10xf32>
    %8 = tpu.matmul %0, %1, %cst {dimension_numbers = #tpu.dot_dimension_numbers<[1], [0], [0], [1], [0, 0, 1, 1], [], []>} : vector<8x20xf32>, vector<20x10xf32>, vector<8x10xf32> -> vector<8x10xf32>
    %9 = arith.mulf %8, %8 : vector<8x10xf32>
    %10 = tpu.concatenate %8, %9 in 1 : vector<8x10xf32>, vector<8x10xf32> -> vector<8x20xf32>
    %cst_5 = arith.constant dense<0.000000e+00> : vector<20xf32>
    %11 = vector.multi_reduction <add>, %10, %cst_5 [0] : vector<8x20xf32> to vector<20xf32>
    %12 = vector.shape_cast %11 : vector<20xf32> to vector<1x20xf32>
    %13 = vector.extract_strided_slice %12 {offsets = [0, 0], sizes = [1, 10], strides = [1, 1]} : vector<1x20xf32> to vector<1x10xf32>
    %cst_6 = arith.constant 1.250000e-01 : f32
    %14 = vector.broadcast %cst_6 : f32 to vector<1x10xf32>
    %15 = arith.mulf %13, %14 : vector<1x10xf32>
    %16 = vector.extract_strided_slice %12 {offsets = [0, 10], sizes = [1, 10], strides = [1, 1]} : vector<1x20xf32> to vector<1x10xf32>
    %cst_7 = arith.constant 1.250000e-01 : f32
    %17 = vector.broadcast %cst_7 : f32 to vector<1x10xf32>
    %18 = arith.mulf %16, %17 : vector<1x10xf32>
    %19 = arith.mulf %15, %15 : vector<1x10xf32>
    %20 = arith.subf %18, %19 : vector<1x10xf32>
    %cst_8 = arith.constant 0.000000e+00 : f32
    %21 = vector.broadcast %cst_8 : f32 to vector<1x10xf32>
    %22 = arith.maximumf %20, %21 : vector<1x10xf32>
    %cst_9 = arith.constant 9.99999974E-6 : f32
    %23 = vector.broadcast %cst_9 : f32 to vector<1x10xf32>
    %24 = arith.addf %22, %23 : vector<1x10xf32>
    %25 = math.rsqrt %24 : vector<1x10xf32>
    %26 = arith.mulf %4, %25 : vector<1x10xf32>
    %27 = arith.mulf %15, %26 : vector<1x10xf32>
    %28 = arith.subf %5, %27 : vector<1x10xf32>
    %29 = vector.broadcast %26 : vector<1x10xf32> to vector<8x10xf32>
    %30 = arith.mulf %8, %29 : vector<8x10xf32>
    %31 = vector.broadcast %28 : vector<1x10xf32> to vector<8x10xf32>
    %32 = arith.addf %30, %31 : vector<8x10xf32>
    %cst_10 = arith.constant 0.000000e+00 : f32
    %33 = vector.broadcast %cst_10 : f32 to vector<8x10xf32>
    %34 = arith.maximumf %32, %33 : vector<8x10xf32>
    %cst_11 = arith.constant dense<0.000000e+00> : vector<8x10xf32>
    %35 = tpu.matmul %34, %2, %cst_11 {dimension_numbers = #tpu.dot_dimension_numbers<[1], [0], [0], [1], [0, 0, 1, 1], [], []>} : vector<8x10xf32>, vector<10x10xf32>, vector<8x10xf32> -> vector<8x10xf32>
    %36 = arith.mulf %35, %35 : vector<8x10xf32>
    %37 = tpu.concatenate %35, %36 in 1 : vector<8x10xf32>, vector<8x10xf32> -> vector<8x20xf32>
    %cst_12 = arith.constant dense<0.000000e+00> : vector<20xf32>
    %38 = vector.multi_reduction <add>, %37, %cst_12 [0] : vector<8x20xf32> to vector<20xf32>
    %39 = vector.shape_cast %38 : vector<20xf32> to vector<1x20xf32>
    %40 = vector.extract_strided_slice %39 {offsets = [0, 0], sizes = [1, 10], strides = [1, 1]} : vector<1x20xf32> to vector<1x10xf32>
    %cst_13 = arith.constant 1.250000e-01 : f32
    %41 = vector.broadcast %cst_13 : f32 to vector<1x10xf32>
    %42 = arith.mulf %40, %41 : vector<1x10xf32>
    %43 = vector.extract_strided_slice %39 {offsets = [0, 10], sizes = [1, 10], strides = [1, 1]} : vector<1x20xf32> to vector<1x10xf32>
    %cst_14 = arith.constant 1.250000e-01 : f32
    %44 = vector.broadcast %cst_14 : f32 to vector<1x10xf32>
    %45 = arith.mulf %43, %44 : vector<1x10xf32>
    %46 = arith.mulf %42, %42 : vector<1x10xf32>
    %47 = arith.subf %45, %46 : vector<1x10xf32>
    %cst_15 = arith.constant 0.000000e+00 : f32
    %48 = vector.broadcast %cst_15 : f32 to vector<1x10xf32>
    %49 = arith.maximumf %47, %48 : vector<1x10xf32>
    %cst_16 = arith.constant 9.99999974E-6 : f32
    %50 = vector.broadcast %cst_16 : f32 to vector<1x10xf32>
    %51 = arith.addf %49, %50 : vector<1x10xf32>
    %52 = math.rsqrt %51 : vector<1x10xf32>
    %53 = arith.mulf %6, %52 : vector<1x10xf32>
    %54 = arith.mulf %42, %53 : vector<1x10xf32>
    %55 = arith.subf %7, %54 : vector<1x10xf32>
    %56 = vector.broadcast %53 : vector<1x10xf32> to vector<8x10xf32>
    %57 = arith.mulf %35, %56 : vector<8x10xf32>
    %58 = vector.broadcast %55 : vector<1x10xf32> to vector<8x10xf32>
    %59 = arith.addf %57, %58 : vector<8x10xf32>
    %c0_17 = arith.constant 0 : index
    %c0_18 = arith.constant 0 : index
    %60 = vector.load %arg2[%c0_17, %c0_18] : memref<8x10xf32, #tpu.memory_space<vmem>>, vector<8x10xf32>
    tpu.vector_store %arg2[%c0_17, %c0_18], %59 {strides = array<i32>} : memref<8x10xf32, #tpu.memory_space<vmem>>, vector<8x10xf32>,
    return
  }
}

</mosaic_0001>

<llo_original>
// kernel: tpu_custom_call.1
$region0: #{tpu_custom_call.1}
  #allocation0 [shape = 'u32[]', space=smem, size = 0x4, offset = 0x4, fixed_abs, tag = 'smem constant byte address 0x4 - core index']
  #allocation1 [shape = 'u32[72,128]{1,0:T(1,128)}', space=vmem, size = 0x9000, scoped, tag = 'internal scratch']
  %s0 = inlined_call_operand.vmem [shape: f32[8,20], index: 0, kind: input, shape index: {}]
  %s1 = inlined_call_operand.vmem [shape: f32[48,10], index: 1, kind: input, shape index: {}]
  %s2 = inlined_call_operand.hbm [shape: f32[8,10], index: 2, kind: output, shape index: {}]
  %s3 = sld [smem:[#allocation0]]
  $region18: #{tpu_custom_call.1} parent=0
    _
  %s5 = ssub.s32 1, %s3
  %s6 = scalar_select 0, %s5, %s3
  $region1: #{tpu_custom_call.1} parent=0
    #allocation2 [shape = 'u8[4096]{0}', space=vmem, size = 0x1000, scoped, tag = 'output window, operand 0, single buffered']
    #allocation3 [shape = 's32[1]{0}', space=sflag, size = 0x4, scoped, tag = 'scoped memory for tpu_custom_call.1']
    %7 = vsyncpa [#allocation3], 0
    // Predicated region
    $region2: #{tpu_custom_call.1} parent=1 // pred_check
      _
    $region3: #{tpu_custom_call.1} parent=1 // pred_check_branch
      %9 = sbr.rel (0) target = $region5
    $region4: #{tpu_custom_call.1} parent=1 // pred_region
      _
    $region5: #{tpu_custom_call.1} parent=1 // pred_fallthru
      _
    // Predicated region
    $region6: #{tpu_custom_call.1} parent=1 // pred_check
      _
    $region7: #{tpu_custom_call.1} parent=1 // pred_check_branch
      %11 = sbr.rel (0) target = $region9
    $region8: #{tpu_custom_call.1} parent=1 // pred_region
      _
    $region9: #{tpu_custom_call.1} parent=1 // pred_fallthru
      _
    %v12 = vld [vmem:[%s0] sm:$0xff]
    %v13 = vld [vmem:[%s1] sm:$0xff]
    %v14 = vld [vmem:[%s1 + $0x8] sm:$0xff]
    %v15 = vld [vmem:[%s1 + $0x10] sm:$0xf]
    %v16 = vld [vmem:[%s1 + $0x18] sm:$0xff]
    %v17 = vld [vmem:[%s1 + $0x20] sm:$0x3]
    %v18 = vld [vmem:[%s1 + $0x28] sm:$0xff]
    %vm19 = vcmask 162816
    %v21 = vsel %vm19, %v12, 0
    %vm23 = vcmask 1043456
    %v25 = vsel %vm23, %v15, 0
    %27 = vmatpush.msra.mxu0 0.0
    %28 = vmatpush.msra.mxu0 0.0
    %29 = vmatpush.msra.mxu0 0.0
    %30 = vmatpush.msra.mxu0 0.0
    %31 = vmatpush.msra.mxu0 0.0
    %32 = vmatpush.msra.mxu0 0.0
    %33 = vmatpush.msra.mxu0 0.0
    %34 = vmatpush.msra.mxu0 0.0
    %35 = vmatpush.msra.mxu0 0.0
    %36 = vmatpush.msra.mxu0 0.0
    %37 = vmatpush.msra.mxu0 0.0
    %38 = vmatpush.msra.mxu0 0.0
    %39 = vmatpush.msra.mxu0 0.0
    %40 = vmatpush.msra.mxu0 %v25
    %41 = vmatpush.msra.mxu0 %v14
    %42 = vmatpush.msra.mxu0 %v13
    %43 = vmatmul.f32.gmra.mxu0 %v21
    %v44 = vpop.f32.mrf.mxu0
    %v45 = vadd.f32 0.0, %v44
    %46 = vdwg.mxu0
    %v47 = vmul.f32 %v45, %v45
    %49 = vrot.lane.b32.xlu0 %v47, 10
    %v50 = vpop.permute.xlu0 %49
    %vm52 = vcmask 80896
    %v53 = vsel %vm52, %v45, %v50
    %v54 = vsel %vm19, %v53, 0.0
    %v55 = vrot.slane %v54, 4
    %v56 = vadd.f32 %v54, %v55
    %v57 = vrot.slane %v56, 2
    %v58 = vadd.f32 %v56, %v57
    %v59 = vrot.slane %v58, 1
    %v60 = vadd.f32 %v58, %v59
    %v61 = vmul.f32 %v60, 0.125
    %v62 = vmul.f32 %v61, %v61
    %64 = vrot.lane.b32.xlu0 %v62, 10
    %v65 = vpop.permute.xlu0 %64
    %v67 = vsub.f32 %v61, %v65
    %v68 = vmax.f32 %v67, 0.0
    %v69 = vadd.f32 %v68, 1e-05
    %v70 = vrsqrt.pop %v69
    %v71 = vmul.f32 %v70, %v69
    %v72 = vmul.f32 %v71, %v70
    %v73 = vmul.f32 0.5, %v72
    %v74 = vsub.f32 1.5, %v73
    %v75 = vmul.f32 %v70, %v74
    %vm76 = vweird.f32 %v69
    %vm77 = vweird.f32 %v70
    %vm78 = vmor %vm76, %vm77
    %v79 = vsel %vm78, %v70, %v75
    %81 = vrot.lane.b32.xlu0 %v79, 118
    %v82 = vpop.permute.xlu0 %81
    %v84 = vmul.f32 %v18, %v82
    %v85 = vmul.f32 %v61, %v84
    %v87 = vrot.slane %v85, 7
    %v89 = vsub.f32 %v18, %v87
    %v90 = vperm.slane %v84, 0
    %v91 = vmul.f32 %v45, %v90
    %v92 = vperm.slane %v89, 1
    %v93 = vadd.f32 %v91, %v92
    %v94 = vmax.f32 %v93, 0.0
    %v96 = vsel %vm52, %v94, 0
    %vm98 = vcmask 1041408
    %v100 = vsel %vm98, %v17, 0
    %102 = vmatpush.msra.mxu0 0.0
    %103 = vmatpush.msra.mxu0 0.0
    %104 = vmatpush.msra.mxu0 0.0
    %105 = vmatpush.msra.mxu0 0.0
    %106 = vmatpush.msra.mxu0 0.0
    %107 = vmatpush.msra.mxu0 0.0
    %108 = vmatpush.msra.mxu0 0.0
    %109 = vmatpush.msra.mxu0 0.0
    %110 = vmatpush.msra.mxu0 0.0
    %111 = vmatpush.msra.mxu0 0.0
    %112 = vmatpush.msra.mxu0 0.0
    %113 = vmatpush.msra.mxu0 0.0
    %114 = vmatpush.msra.mxu0 0.0
    %115 = vmatpush.msra.mxu0 0.0
    %116 = vmatpush.msra.mxu0 %v100
    %117 = vmatpush.msra.mxu0 %v16
    %118 = vmatmul.f32.gmra.mxu0 %v96
    %v119 = vpop.f32.mrf.mxu0
    %v120 = vadd.f32 0.0, %v119
    %121 = vdwg.mxu0
    %v122 = vmul.f32 %v120, %v120
    %124 = vrot.lane.b32.xlu0 %v122, 10
    %v125 = vpop.permute.xlu0 %124
    %v127 = vsel %vm52, %v120, %v125
    %v128 = vsel %vm19, %v127, 0.0
    %v129 = vrot.slane %v128, 4
    %v130 = vadd.f32 %v128, %v129
    %v131 = vrot.slane %v130, 2
    %v132 = vadd.f32 %v130, %v131
    %v133 = vrot.slane %v132, 1
    %v134 = vadd.f32 %v132, %v133
    %v135 = vmul.f32 %v134, 0.125
    %v136 = vmul.f32 %v135, %v135
    %138 = vrot.lane.b32.xlu0 %v136, 10
    %v139 = vpop.permute.xlu0 %138
    %v141 = vsub.f32 %v135, %v139
    %v142 = vmax.f32 %v141, 0.0
    %v143 = vadd.f32 %v142, 1e-05
    %v144 = vrsqrt.pop %v143
    %v145 = vmul.f32 %v144, %v143
    %v146 = vmul.f32 %v145, %v144
    %v147 = vmul.f32 0.5, %v146
    %v148 = vsub.f32 1.5, %v147
    %v149 = vmul.f32 %v144, %v148
    %vm150 = vweird.f32 %v143
    %vm151 = vweird.f32 %v144
    %vm152 = vmor %vm150, %vm151
    %v153 = vsel %vm152, %v144, %v149
    %v155 = vrot.slane %v153, 6
    %156 = vrot.lane.b32.xlu0 %v155, 118
    %v157 = vpop.permute.xlu0 %156
    %v159 = vmul.f32 %v18, %v157
    %v160 = vmul.f32 %v135, %v159
    %v162 = vrot.slane %v160, 7
    %v164 = vsub.f32 %v18, %v162
    %v165 = vperm.slane %v159, 2
    %v166 = vmul.f32 %v120, %v165
    %v167 = vperm.slane %v164, 3
    %v168 = vadd.f32 %v166, %v167
    %169 = vst.msk [vmem:[#allocation2] sm:$0xff] %vm52, %v168
    // Predicated region
    $region10: #{tpu_custom_call.1} parent=1 // pred_check
      _
    $region11: #{tpu_custom_call.1} parent=1 // pred_check_branch
      %171 = sbr.rel (0) target = $region13
    $region12: #{tpu_custom_call.1} parent=1 // pred_region
      %173 = vsyncadd [#allocation3], 0
      %s175 = sshll.u32 [#allocation2], 4
      %s176 = int_to_ptr.vmem [resolvable:$true] %s175
      %s177 = sshll.u32 %s2, 4
      %s178 = int_to_ptr.hbm [resolvable:$true] %s177
      %180 = dma.vmem_to_hbm [thread:$0]  %s176, 128, %s178, [#allocation3]
    $region13: #{tpu_custom_call.1} parent=1 // pred_fallthru
      _
    // Predicated region
    $region14: #{tpu_custom_call.1} parent=1 // pred_check
      _
    $region15: #{tpu_custom_call.1} parent=1 // pred_check_branch
      %182 = sbr.rel (0) target = $region17
    $region16: #{tpu_custom_call.1} parent=1 // pred_region
      %184 = dma.done [#allocation3], 128
    $region17: #{tpu_custom_call.1} parent=1 // pred_fallthru
      _
    %185 = vsyncpa [#allocation3], 1

</llo_original>
